<compile_context>
chip_gen: v7x
topology: tpu7x:2x2x1
jax: 0.10.0
libtpu: 0.0.40
codegen_flags: <defaults>
</compile_context>

<pallas_src>
import functools

import jax
import jax.numpy as jnp
from jax.experimental import pallas as pl
from jax.experimental.pallas import tpu as pltpu


def _chan_layernorm_kernel(x_ref, g_ref, o_ref, *, eps, stable):
    # x_ref: (C, S_tile) tile; g_ref: (C, 1) channel gains.
    x = x_ref[...].astype(jnp.float32)                       # (C, S)
    if stable:
        x = x / jnp.max(x, axis=0, keepdims=True)
    mean = jnp.mean(x, axis=0, keepdims=True)                # (1, S) XLU reduce
    centered = x - mean                                      # (C, S)
    var = jnp.mean(centered * centered, axis=0, keepdims=True)
    inv = jax.lax.rsqrt(var + eps)                           # single EUP op
    gamma = g_ref[...].astype(jnp.float32)                   # (C, 1)
    # Fused two-vmul broadcast; no (C, S) coefficient materialized.
    o_ref[...] = (centered * inv * gamma).astype(o_ref.dtype)


def _pick_s_tile(s_total, c, budget_bytes=2 * 1024 * 1024):
    """Largest multiple of 128 dividing s_total with C*S_tile*4B <= budget."""
    if s_total % 128 != 0:
        return s_total  # full-dim fallback (allowed by the (8,128) rule)
    max_tile = max(128, (budget_bytes // (c * 4) // 128) * 128)
    if s_total <= max_tile:
        return s_total
    best = 128
    t = 128
    while t <= max_tile:
        if s_total % t == 0:
            best = t
        t += 128
    return best


def chan_layernorm(x, g, *, stable=False):
    """x: (B, C, F, H, W); g: (1, C, 1, 1, 1). Returns same shape/dtype as x."""
    B, C, F, H, W = x.shape
    S = F * H * W
    eps = 1e-5 if x.dtype == jnp.float32 else 1e-3

    # Free reshape: trailing F, H, W are contiguous in NCFHW.
    x_r = x.reshape(B, C, S)
    g_r = g.reshape(C, 1)

    s_tile = _pick_s_tile(S, C)
    grid = (B, S // s_tile)

    kernel = functools.partial(_chan_layernorm_kernel, eps=eps, stable=stable)

    out_r = pl.pallas_call(
        kernel,
        out_shape=jax.ShapeDtypeStruct((B, C, S), x.dtype),
        grid_spec=pltpu.PrefetchScalarGridSpec(
            num_scalar_prefetch=0,
            grid=grid,
            in_specs=[
                pl.BlockSpec((None, C, s_tile), lambda b, s: (b, 0, s)),
                pl.BlockSpec((C, 1), lambda b, s: (0, 0)),   # gamma, shared
            ],
            out_specs=pl.BlockSpec((None, C, s_tile), lambda b, s: (b, 0, s)),
        ),
        compiler_params=pltpu.CompilerParams(
            dimension_semantics=("parallel", "parallel"),
        ),
    )(x_r, g_r)

    return out_r.reshape(B, C, F, H, W)


def chan_layernorm_ref(x, g, *, stable=False):
    # Pure-JAX reference matching the PyTorch module forward.
    eps = 1e-5 if x.dtype == jnp.float32 else 1e-3
    xf = x.astype(jnp.float32)
    if stable:
        xf = xf / jnp.max(xf, axis=1, keepdims=True)
    mean = jnp.mean(xf, axis=1, keepdims=True)
    var = jnp.mean((xf - mean) ** 2, axis=1, keepdims=True)  # unbiased=False
    out = (xf - mean) * jax.lax.rsqrt(var + eps) * g.astype(jnp.float32)
    return out.astype(x.dtype)


if __name__ == "__main__":
    key = jax.random.PRNGKey(0)
    B, C, F, H, W = 2, 8, 4, 16, 16  # NCFHW
    x = jax.random.normal(key, (B, C, F, H, W), dtype=jnp.float32)
    # Parameter init per module __init__: g = ones(1, dim, 1, 1, 1)
    g = jnp.ones((1, C, 1, 1, 1), dtype=jnp.float32)

    out = chan_layernorm(x, g)
    out = jax.block_until_ready(out)

    ref = chan_layernorm_ref(x, g)
    assert out.shape == x.shape and out.dtype == x.dtype
    assert jnp.allclose(out, ref, atol=1e-5, rtol=1e-5), "mismatch vs reference"

    print("KERNEL_OK")
</pallas_src>

<mosaic_0001>
module attributes {stable_mosaic.version = 11 : i64} {
  func.func @_chan_layernorm_kernel(%arg0: i32, %arg1: i32, %arg2: memref<1x8x1024xf32, #tpu.memory_space<vmem>>, %arg3: memref<8x1xf32, #tpu.memory_space<vmem>>, %arg4: memref<1x8x1024xf32, #tpu.memory_space<vmem>>) attributes {dimension_semantics = [#tpu.dimension_semantics<parallel>, #tpu.dimension_semantics<parallel>], iteration_bounds = array<i64: 2, 1>, scalar_prefetch = 0 : i64, scratch_operands = 0 : i64, tpu.core_type = #tpu.core_type<tc>, window_params = [{transform_indices = @transform_0, window_bounds = array<i64: 1, 8, 1024>}, {pipeline_mode = #tpu.pipeline_mode<synchronous>, transform_indices = @transform_1, window_bounds = array<i64: 8, 1>}, {transform_indices = @transform_2, window_bounds = array<i64: 1, 8, 1024>}]} {
    %c0 = arith.constant 0 : index
    %c0_0 = arith.constant 0 : index
    %c0_1 = arith.constant 0 : index
    %0 = vector.load %arg2[%c0, %c0_0, %c0_1] : memref<1x8x1024xf32, #tpu.memory_space<vmem>>, vector<1x8x1024xf32>
    %1 = vector.shape_cast %0 : vector<1x8x1024xf32> to vector<8x1024xf32>
    %cst = arith.constant dense<0.000000e+00> : vector<1024xf32>
    %2 = vector.multi_reduction <add>, %1, %cst [0] : vector<8x1024xf32> to vector<1024xf32>
    %3 = vector.shape_cast %2 : vector<1024xf32> to vector<1x1024xf32>
    %cst_2 = arith.constant 8.000000e+00 : f32
    %4 = vector.broadcast %cst_2 : f32 to vector<1x1024xf32>
    %5 = arith.divf %3, %4 : vector<1x1024xf32>
    %6 = vector.broadcast %5 : vector<1x1024xf32> to vector<8x1024xf32>
    %7 = arith.subf %1, %6 : vector<8x1024xf32>
    %8 = arith.mulf %7, %7 : vector<8x1024xf32>
    %cst_3 = arith.constant dense<0.000000e+00> : vector<1024xf32>
    %9 = vector.multi_reduction <add>, %8, %cst_3 [0] : vector<8x1024xf32> to vector<1024xf32>
    %10 = vector.shape_cast %9 : vector<1024xf32> to vector<1x1024xf32>
    %cst_4 = arith.constant 8.000000e+00 : f32
    %11 = vector.broadcast %cst_4 : f32 to vector<1x1024xf32>
    %12 = arith.divf %10, %11 : vector<1x1024xf32>
    %cst_5 = arith.constant 9.99999974E-6 : f32
    %13 = vector.broadcast %cst_5 : f32 to vector<1x1024xf32>
    %14 = arith.addf %12, %13 : vector<1x1024xf32>
    %15 = math.rsqrt %14 : vector<1x1024xf32>
    %c0_6 = arith.constant 0 : index
    %c0_7 = arith.constant 0 : index
    %16 = vector.load %arg3[%c0_6, %c0_7] : memref<8x1xf32, #tpu.memory_space<vmem>>, vector<8x1xf32>
    %17 = vector.broadcast %15 : vector<1x1024xf32> to vector<8x1024xf32>
    %18 = arith.mulf %7, %17 : vector<8x1024xf32>
    %19 = vector.broadcast %16 : vector<8x1xf32> to vector<8x1024xf32>
    %20 = arith.mulf %18, %19 : vector<8x1024xf32>
    %c0_8 = arith.constant 0 : index
    %c0_9 = arith.constant 0 : index
    %c0_10 = arith.constant 0 : index
    %21 = vector.load %arg4[%c0_8, %c0_9, %c0_10] : memref<1x8x1024xf32, #tpu.memory_space<vmem>>, vector<1x8x1024xf32>
    %22 = vector.shape_cast %21 : vector<1x8x1024xf32> to vector<8x1024xf32>
    %23 = vector.shape_cast %20 : vector<8x1024xf32> to vector<1x8x1024xf32>
    tpu.vector_store %arg4[%c0_8, %c0_9, %c0_10], %23 {strides = array<i32>} : memref<1x8x1024xf32, #tpu.memory_space<vmem>>, vector<1x8x1024xf32>,
    return
  }
  func.func @transform_0(%arg0: i32, %arg1: i32) -> (i32, i32, i32) {
    %c0_i32 = arith.constant 0 : i32
    %c0_i32_0 = arith.constant 0 : i32
    return %arg0, %c0_i32, %arg1 : i32, i32, i32
  }
  func.func @transform_1(%arg0: i32, %arg1: i32) -> (i32, i32) {
    %c0_i32 = arith.constant 0 : i32
    %c0_i32_0 = arith.constant 0 : i32
    %c0_i32_1 = arith.constant 0 : i32
    return %c0_i32, %c0_i32_0 : i32, i32
  }
  func.func @transform_2(%arg0: i32, %arg1: i32) -> (i32, i32, i32) {
    %c0_i32 = arith.constant 0 : i32
    %c0_i32_0 = arith.constant 0 : i32
    return %arg0, %c0_i32, %arg1 : i32, i32, i32
  }
}

</mosaic_0001>

<llo_original>
// kernel: tpu_custom_call.1
$region0: #{tpu_custom_call.1}
  #allocation0 [shape = 'u32[]', space=smem, size = 0x4, offset = 0x4, fixed_abs, tag = 'smem constant byte address 0x4 - core index']
  #allocation1 [shape = 'u32[144,128]{1,0:T(1,128)}', space=vmem, size = 0x12000, scoped, tag = 'internal scratch']
  %s0 = inlined_call_operand.hbm [shape: f32[2,8,1024], index: 0, kind: input, shape index: {}]
  %s1 = inlined_call_operand.vmem [shape: f32[8,1], index: 1, kind: input, shape index: {}]
  %s2 = inlined_call_operand.hbm [shape: f32[2,8,1024], index: 2, kind: output, shape index: {}]
  %s3 = sld [smem:[#allocation0]]
  $region45: #{tpu_custom_call.1} parent=0
    _
  %s5 = ssub.s32 1, %s3
  %s6 = scalar_select 0, %s5, %s3
  $region1: #{tpu_custom_call.1} parent=0
    #allocation2 [shape = 'u8[65536]{0}', space=vmem, size = 0x10000, scoped, tag = 'input window, operand 0']
    #allocation3 [shape = 's32[2]{0}', space=sflag, size = 0x8, scoped, tag = 'scoped memory for tpu_custom_call.1']
    #allocation4 [shape = 's32[2]{0}', space=sflag, size = 0x8, scoped, tag = 'scoped memory for tpu_custom_call.1']
    #allocation5 [shape = 'u8[65536]{0}', space=vmem, size = 0x10000, scoped, tag = 'output window, operand 0']
    %7 = vsyncpa [#allocation3], 0
    %s8 = scalar_lea.sflag [#allocation3], 1
    %9 = vsyncpa %s8, 0
    %10 = vsyncpa [#allocation4], 0
    %s11 = scalar_lea.sflag [#allocation4], 1
    %12 = vsyncpa %s11, 0
    loop: start=0, step=1, limit=4
    $region2: #{tpu_custom_call.1} parent=1 // loop_pre_header
      _
    $region3: #{tpu_custom_call.1} parent=1 // loop_header
      %s14 = sphi 0, %s18
      %p15 = scmp.ge.s32.totalorder %s14, 4
      %s21 = sphi 0, %s33
      %s22 = sphi 0, %s29
      %s23 = sphi 0, %s21
      %s24 = sphi 0, %s22
      %s25 = sphi 0, %s23
      %s26 = sphi 0, %s24
      %s38 = sphi 0, %s40
      %s41 = sphi 0, %s38
      %s42 = sphi 0, %s41
      %s58 = sphi 0, %s42
      %s62 = sphi 0, %s62
      %s64 = sphi 0, %s62
      %s65 = sphi 0, %s64
      %s79 = sphi 0, %s65
      %s87 = sphi 0, %s89
      %s90 = sphi 0, %s87
      %s91 = sphi 0, %s90
      %s107 = sphi 0, %s91
    $region4: #{tpu_custom_call.1} parent=1 // loop_header_branch
      %17 = sbr.rel (%p15) target = $region8
    $region5: #{tpu_custom_call.1} parent=1 // loop_body
      %s19 = ssub.s32 %s14, 1
      %s20 = ssub.s32 %s14, 2
      %s27 = sadd.s32 1, %s22
      %p28 = scmp.ge.s32.totalorder %s27, 1
      %s29 = scalar_select %p28, 0, %s27
      %s30 = sadd.s32 1, %s21
      %s31 = scalar_select %p28, %s30, %s21
      %p32 = scmp.ge.s32.totalorder %s31, 2
      %s33 = scalar_select %p32, 0, %s31
      %s34 = ssub.s32 %s21, %s33
      %s35 = ssub.s32 %s22, %s29
      %s36 = sor.u32 %s34, %s35
      %p37 = scmp.eq.s32.totalorder %s36, 0
      %s39 = sadd.s32 %s38, 1
      %s40 = scalar_select %p37, %s38, %s39
      %p43 = pneg %p37
      %p44 = scmp.eq.s32.totalorder %s14, 1
      %p45 = por %p43, %p44
      %p46 = scmp.ne.s32.totalorder %s38, %s41
      %p47 = scmp.eq.s32.totalorder %s14, 0
      %p48 = por %p46, %p47
      %p49 = scmp.ne.s32.totalorder %s38, %s41
      %p50 = scmp.eq.s32.totalorder %s19, 1
      %p51 = por %p49, %p50
      %p52 = scmp.ne.s32.totalorder %s41, %s42
      %p53 = scmp.eq.s32.totalorder %s19, 0
      %p54 = por %p52, %p53
      %p55 = scmp.ne.s32.totalorder %s41, %s42
      %p56 = scmp.eq.s32.totalorder %s20, 1
      %p57 = por %p55, %p56
      %p59 = scmp.ne.s32.totalorder %s42, %s58
      %p60 = scmp.eq.s32.totalorder %s20, 0
      %p61 = por %p59, %p60
      %s63 = sadd.s32 %s62, 1
      %p66 = scmp.eq.s32.totalorder %s14, 1
      %p67 = scmp.ne.s32.totalorder %s62, %s64
      %p68 = scmp.eq.s32.totalorder %s14, 0
      %p69 = por %p67, %p68
      %p70 = scmp.ne.s32.totalorder %s62, %s64
      %p71 = scmp.eq.s32.totalorder %s19, 1
      %p72 = por %p70, %p71
      %p73 = scmp.ne.s32.totalorder %s64, %s65
      %p74 = scmp.eq.s32.totalorder %s19, 0
      %p75 = por %p73, %p74
      %p76 = scmp.ne.s32.totalorder %s64, %s65
      %p77 = scmp.eq.s32.totalorder %s20, 1
      %p78 = por %p76, %p77
      %p80 = scmp.ne.s32.totalorder %s65, %s79
      %p81 = scmp.eq.s32.totalorder %s20, 0
      %p82 = por %p80, %p81
      %s83 = ssub.s32 %s21, %s33
      %s84 = ssub.s32 %s22, %s29
      %s85 = sor.u32 %s83, %s84
      %p86 = scmp.eq.s32.totalorder %s85, 0
      %s88 = sadd.s32 %s87, 1
      %s89 = scalar_select %p86, %s87, %s88
      %p92 = pneg %p86
      %p93 = scmp.eq.s32.totalorder %s14, 1
      %p94 = por %p92, %p93
      %p95 = scmp.ne.s32.totalorder %s87, %s90
      %p96 = scmp.eq.s32.totalorder %s14, 0
      %p97 = por %p95, %p96
      %p98 = scmp.ne.s32.totalorder %s87, %s90
      %p99 = scmp.eq.s32.totalorder %s19, 1
      %p100 = por %p98, %p99
      %p101 = scmp.ne.s32.totalorder %s90, %s91
      %p102 = scmp.eq.s32.totalorder %s19, 0
      %p103 = por %p101, %p102
      %p104 = scmp.ne.s32.totalorder %s90, %s91
      %p105 = scmp.eq.s32.totalorder %s20, 1
      %p106 = por %p104, %p105
      %p108 = scmp.ne.s32.totalorder %s91, %s107
      %p109 = scmp.eq.s32.totalorder %s20, 0
      %p110 = por %p108, %p109
      %p111 = scmp.le.s32.totalorder 1, %s14
      %p112 = scmp.lt.s32.totalorder %s14, 3
      %p113 = pnand %p111, %p112
      %p114 = pneg %p113
      // Predicated region
      $region9: #{tpu_custom_call.1} parent=5 // pred_check
        _
      $region10: #{tpu_custom_call.1} parent=5 // pred_check_branch
        %116 = sbr.rel (%p113) target = $region12
      $region11: #{tpu_custom_call.1} parent=5 // pred_region
        %s117 = ssub.s32 %s14, 1
        // Predicated region
        $region13: #{tpu_custom_call.1} parent=11 // pred_check
          %p118 = pneg %p75
        $region14: #{tpu_custom_call.1} parent=11 // pred_check_branch
          %120 = sbr.rel (%p118) target = $region16
        $region15: #{tpu_custom_call.1} parent=11 // pred_region
          _
        $region16: #{tpu_custom_call.1} parent=11 // pred_fallthru
          _
      $region12: #{tpu_custom_call.1} parent=5 // pred_fallthru
        _
      %p121 = scmp.lt.s32.totalorder %s14, 2
      // Predicated region
      $region17: #{tpu_custom_call.1} parent=5 // pred_check
        %p122 = pneg %p121
      $region18: #{tpu_custom_call.1} parent=5 // pred_check_branch
        %124 = sbr.rel (%p122) target = $region20
      $region19: #{tpu_custom_call.1} parent=5 // pred_region
        // Predicated region
        $region21: #{tpu_custom_call.1} parent=19 // pred_check
          %p125 = pneg %p48
        $region22: #{tpu_custom_call.1} parent=19 // pred_check_branch
          %127 = sbr.rel (%p125) target = $region24
        $region23: #{tpu_custom_call.1} parent=19 // pred_region
          %s128 = sand.u32 %s38, 1
          %s129 = scalar_lea.sflag [#allocation3], %s128
          %s130 = sand.u32 %s38, 1
          %s131 = smul.addr %s130, 64
          %s132 = scalar_lea.vmem [#allocation2], %s131
          %s133 = smul.u32 8, %s22
          %s135 = ssub.s32 1024, 1024
          %136 = vsyncadd %s129, %s135
          %s137 = smul.addr %s21, 8
          %s138 = sadd.s32 %s133, %s137
          %s139 = smul.addr %s138, 128
          %s140 = scalar_lea.hbm %s0, %s139
          %s142 = sshll.u32 %s132, 4
          %s143 = int_to_ptr.vmem [resolvable:$true] %s142
          %145 = dma.hbm_to_vmem [thread:$0]  %s140, 1024, %s143, %s129
        $region24: #{tpu_custom_call.1} parent=19 // pred_fallthru
          _
      $region20: #{tpu_custom_call.1} parent=5 // pred_fallthru
        _
      %p146 = scmp.le.s32.totalorder 1, %s14
      %p147 = scmp.lt.s32.totalorder %s14, 3
      %p148 = pnand %p146, %p147
      %p149 = pneg %p148
      // Predicated region
      $region25: #{tpu_custom_call.1} parent=5 // pred_check
        _
      $region26: #{tpu_custom_call.1} parent=5 // pred_check_branch
        %151 = sbr.rel (%p148) target = $region28
      $region27: #{tpu_custom_call.1} parent=5 // pred_region
        %s152 = ssub.s32 %s14, 1
        %s153 = sand.u32 %s41, 1
        %s154 = scalar_lea.sflag [#allocation3], %s153
        %s155 = sand.u32 %s41, 1
        %s156 = smul.addr %s155, 64
        %s157 = scalar_lea.vmem [#allocation2], %s156
        // Predicated region
        $region29: #{tpu_custom_call.1} parent=27 // pred_check
          %p158 = pneg %p54
        $region30: #{tpu_custom_call.1} parent=27 // pred_check_branch
          %160 = sbr.rel (%p158) target = $region32
        $region31: #{tpu_custom_call.1} parent=27 // pred_region
          %161 = dma.done %s154, 1024
        $region32: #{tpu_custom_call.1} parent=27 // pred_fallthru
          _
        %s162 = sand.u32 %s41, 1
        %s163 = scalar_lea.sflag [#allocation3], %s162
        %s164 = sand.u32 %s41, 1
        %s165 = smul.addr %s164, 64
        %s166 = scalar_lea.vmem [#allocation2], %s165
        %p167 = pneg %p54
        %p168 = pneg %p51
        %p169 = pneg %p75
        %p170 = pneg %p72
        %p171 = pneg %p103
        %p172 = pneg %p100
        %s173 = sand.u32 %s90, 1
        %s174 = scalar_lea.sflag [#allocation4], %s173
        %s175 = sand.u32 %s90, 1
        %s176 = smul.addr %s175, 64
        %s177 = scalar_lea.vmem [#allocation5], %s176
        %s178 = smul.u32 8, %s24
        %s179 = smul.u32 8, %s24
        %v180 = vld [vmem:[%s157] sm:$0xff]
        %v181 = vld [vmem:[%s157 + $0x8] sm:$0xff]
        %v182 = vld [vmem:[%s157 + $0x10] sm:$0xff]
        %v183 = vld [vmem:[%s157 + $0x18] sm:$0xff]
        %v184 = vld [vmem:[%s157 + $0x20] sm:$0xff]
        %v185 = vld [vmem:[%s157 + $0x28] sm:$0xff]
        %v186 = vld [vmem:[%s157 + $0x30] sm:$0xff]
        %v187 = vld [vmem:[%s157 + $0x38] sm:$0xff]
        %v188 = vrot.slane %v180, 4
        %v189 = vadd.f32 %v180, %v188
        %v190 = vrot.slane %v189, 2
        %v191 = vadd.f32 %v189, %v190
        %v192 = vrot.slane %v191, 1
        %v193 = vadd.f32 %v191, %v192
        %v194 = vrot.slane %v181, 4
        %v195 = vadd.f32 %v181, %v194
        %v196 = vrot.slane %v195, 2
        %v197 = vadd.f32 %v195, %v196
        %v198 = vrot.slane %v197, 1
        %v199 = vadd.f32 %v197, %v198
        %v200 = vrot.slane %v182, 4
        %v201 = vadd.f32 %v182, %v200
        %v202 = vrot.slane %v201, 2
        %v203 = vadd.f32 %v201, %v202
        %v204 = vrot.slane %v203, 1
        %v205 = vadd.f32 %v203, %v204
        %v206 = vrot.slane %v183, 4
        %v207 = vadd.f32 %v183, %v206
        %v208 = vrot.slane %v207, 2
        %v209 = vadd.f32 %v207, %v208
        %v210 = vrot.slane %v209, 1
        %v211 = vadd.f32 %v209, %v210
        %v212 = vrot.slane %v184, 4
        %v213 = vadd.f32 %v184, %v212
        %v214 = vrot.slane %v213, 2
        %v215 = vadd.f32 %v213, %v214
        %v216 = vrot.slane %v215, 1
        %v217 = vadd.f32 %v215, %v216
        %v218 = vrot.slane %v185, 4
        %v219 = vadd.f32 %v185, %v218
        %v220 = vrot.slane %v219, 2
        %v221 = vadd.f32 %v219, %v220
        %v222 = vrot.slane %v221, 1
        %v223 = vadd.f32 %v221, %v222
        %v224 = vrot.slane %v186, 4
        %v225 = vadd.f32 %v186, %v224
        %v226 = vrot.slane %v225, 2
        %v227 = vadd.f32 %v225, %v226
        %v228 = vrot.slane %v227, 1
        %v229 = vadd.f32 %v227, %v228
        %v230 = vrot.slane %v187, 4
        %v231 = vadd.f32 %v187, %v230
        %v232 = vrot.slane %v231, 2
        %v233 = vadd.f32 %v231, %v232
        %v234 = vrot.slane %v233, 1
        %v235 = vadd.f32 %v233, %v234
        %v236 = vrcp.pop 8.0
        %v237 = vmul.f32 %v193, %v236
        %v238 = vmul.f32 %v199, %v236
        %v239 = vmul.f32 %v205, %v236
        %v240 = vmul.f32 %v211, %v236
        %v241 = vmul.f32 %v217, %v236
        %v242 = vmul.f32 %v223, %v236
        %v243 = vmul.f32 %v229, %v236
        %v244 = vmul.f32 %v235, %v236
        %v245 = vsub.f32 %v180, %v237
        %v246 = vsub.f32 %v181, %v238
        %v247 = vsub.f32 %v182, %v239
        %v248 = vsub.f32 %v183, %v240
        %v249 = vsub.f32 %v184, %v241
        %v250 = vsub.f32 %v185, %v242
        %v251 = vsub.f32 %v186, %v243
        %v252 = vsub.f32 %v187, %v244
        %v253 = vmul.f32 %v245, %v245
        %v254 = vmul.f32 %v246, %v246
        %v255 = vmul.f32 %v247, %v247
        %v256 = vmul.f32 %v248, %v248
        %v257 = vmul.f32 %v249, %v249
        %v258 = vmul.f32 %v250, %v250
        %v259 = vmul.f32 %v251, %v251
        %v260 = vmul.f32 %v252, %v252
        %v261 = vrot.slane %v253, 4
        %v262 = vadd.f32 %v253, %v261
        %v263 = vrot.slane %v262, 2
        %v264 = vadd.f32 %v262, %v263
        %v265 = vrot.slane %v264, 1
        %v266 = vadd.f32 %v264, %v265
        %v267 = vrot.slane %v254, 4
        %v268 = vadd.f32 %v254, %v267
        %v269 = vrot.slane %v268, 2
        %v270 = vadd.f32 %v268, %v269
        %v271 = vrot.slane %v270, 1
        %v272 = vadd.f32 %v270, %v271
        %v273 = vrot.slane %v255, 4
        %v274 = vadd.f32 %v255, %v273
        %v275 = vrot.slane %v274, 2
        %v276 = vadd.f32 %v274, %v275
        %v277 = vrot.slane %v276, 1
        %v278 = vadd.f32 %v276, %v277
        %v279 = vrot.slane %v256, 4
        %v280 = vadd.f32 %v256, %v279
        %v281 = vrot.slane %v280, 2
        %v282 = vadd.f32 %v280, %v281
        %v283 = vrot.slane %v282, 1
        %v284 = vadd.f32 %v282, %v283
        %v285 = vrot.slane %v257, 4
        %v286 = vadd.f32 %v257, %v285
        %v287 = vrot.slane %v286, 2
        %v288 = vadd.f32 %v286, %v287
        %v289 = vrot.slane %v288, 1
        %v290 = vadd.f32 %v288, %v289
        %v291 = vrot.slane %v258, 4
        %v292 = vadd.f32 %v258, %v291
        %v293 = vrot.slane %v292, 2
        %v294 = vadd.f32 %v292, %v293
        %v295 = vrot.slane %v294, 1
        %v296 = vadd.f32 %v294, %v295
        %v297 = vrot.slane %v259, 4
        %v298 = vadd.f32 %v259, %v297
        %v299 = vrot.slane %v298, 2
        %v300 = vadd.f32 %v298, %v299
        %v301 = vrot.slane %v300, 1
        %v302 = vadd.f32 %v300, %v301
        %v303 = vrot.slane %v260, 4
        %v304 = vadd.f32 %v260, %v303
        %v305 = vrot.slane %v304, 2
        %v306 = vadd.f32 %v304, %v305
        %v307 = vrot.slane %v306, 1
        %v308 = vadd.f32 %v306, %v307
        %v309 = vmul.f32 %v266, %v236
        %v310 = vmul.f32 %v272, %v236
        %v311 = vmul.f32 %v278, %v236
        %v312 = vmul.f32 %v284, %v236
        %v313 = vmul.f32 %v290, %v236
        %v314 = vmul.f32 %v296, %v236
        %v315 = vmul.f32 %v302, %v236
        %v316 = vmul.f32 %v308, %v236
        %v317 = vadd.f32 %v309, 1e-05
        %v318 = vadd.f32 %v310, 1e-05
        %v319 = vadd.f32 %v311, 1e-05
        %v320 = vadd.f32 %v312, 1e-05
        %v321 = vadd.f32 %v313, 1e-05
        %v322 = vadd.f32 %v314, 1e-05
        %v323 = vadd.f32 %v315, 1e-05
        %v324 = vadd.f32 %v316, 1e-05
        %v325 = vrsqrt.pop %v317
        %v326 = vrsqrt.pop %v318
        %v327 = vrsqrt.pop %v319
        %v328 = vrsqrt.pop %v320
        %v329 = vrsqrt.pop %v321
        %v330 = vrsqrt.pop %v322
        %v331 = vrsqrt.pop %v323
        %v332 = vrsqrt.pop %v324
        %v333 = vld [vmem:[%s1] sm:$0xff]
        %v334 = vmul.f32 %v245, %v325
        %v335 = vmul.f32 %v246, %v326
        %v336 = vmul.f32 %v247, %v327
        %v337 = vmul.f32 %v248, %v328
        %v338 = vmul.f32 %v249, %v329
        %v339 = vmul.f32 %v250, %v330
        %v340 = vmul.f32 %v251, %v331
        %v341 = vmul.f32 %v252, %v332
        %343 = vset.pattern.permute.xlu0 0
        %344 = vperm.xlu0 %343, %v333
        %v345 = vpop.permute.xlu0 %344
        %v347 = vmul.f32 %v334, %v345
        %v348 = vmul.f32 %v335, %v345
        %v349 = vmul.f32 %v336, %v345
        %v350 = vmul.f32 %v337, %v345
        %v351 = vmul.f32 %v338, %v345
        %v352 = vmul.f32 %v339, %v345
        %v353 = vmul.f32 %v340, %v345
        %v354 = vmul.f32 %v341, %v345
        %355 = vst [vmem:[%s177] sm:$0xff] %v347
        %356 = vst [vmem:[%s177 + $0x8] sm:$0xff] %v348
        %357 = vst [vmem:[%s177 + $0x10] sm:$0xff] %v349
        %358 = vst [vmem:[%s177 + $0x18] sm:$0xff] %v350
        %359 = vst [vmem:[%s177 + $0x20] sm:$0xff] %v351
        %360 = vst [vmem:[%s177 + $0x28] sm:$0xff] %v352
        %361 = vst [vmem:[%s177 + $0x30] sm:$0xff] %v353
        %362 = vst [vmem:[%s177 + $0x38] sm:$0xff] %v354
        %s363 = sand.u32 %s90, 1
        %s364 = scalar_lea.sflag [#allocation4], %s363
        %s365 = sand.u32 %s90, 1
        %s366 = smul.addr %s365, 64
        %s367 = scalar_lea.vmem [#allocation5], %s366
        // Predicated region
        $region33: #{tpu_custom_call.1} parent=27 // pred_check
          %p368 = pneg %p100
        $region34: #{tpu_custom_call.1} parent=27 // pred_check_branch
          %370 = sbr.rel (%p368) target = $region36
        $region35: #{tpu_custom_call.1} parent=27 // pred_region
          %s371 = smul.u32 8, %s24
          %s373 = ssub.s32 1024, 1024
          %374 = vsyncadd %s364, %s373
          %s375 = smul.addr %s23, 8
          %s376 = sadd.s32 %s371, %s375
          %s377 = smul.addr %s376, 128
          %s378 = scalar_lea.hbm %s2, %s377
          %s380 = sshll.u32 %s367, 4
          %s381 = int_to_ptr.vmem [resolvable:$true] %s380
          %383 = dma.vmem_to_hbm [thread:$0]  %s381, 1024, %s378, %s364
        $region36: #{tpu_custom_call.1} parent=27 // pred_fallthru
          _
      $region28: #{tpu_custom_call.1} parent=5 // pred_fallthru
        _
      %p384 = scmp.le.s32.totalorder 2, %s14
      // Predicated region
      $region37: #{tpu_custom_call.1} parent=5 // pred_check
        %p385 = pneg %p384
      $region38: #{tpu_custom_call.1} parent=5 // pred_check_branch
        %387 = sbr.rel (%p385) target = $region40
      $region39: #{tpu_custom_call.1} parent=5 // pred_region
        %s388 = ssub.s32 %s14, 2
        // Predicated region
        $region41: #{tpu_custom_call.1} parent=39 // pred_check
          %p389 = pneg %p106
        $region42: #{tpu_custom_call.1} parent=39 // pred_check_branch
          %391 = sbr.rel (%p389) target = $region44
        $region43: #{tpu_custom_call.1} parent=39 // pred_region
          %s392 = sand.u32 %s91, 1
          %s393 = scalar_lea.sflag [#allocation4], %s392
          %s394 = sand.u32 %s91, 1
          %s395 = smul.addr %s394, 64
          %s396 = scalar_lea.vmem [#allocation5], %s395
          %397 = dma.done %s393, 1024
        $region44: #{tpu_custom_call.1} parent=39 // pred_fallthru
          _
      $region40: #{tpu_custom_call.1} parent=5 // pred_fallthru
        _
    $region6: #{tpu_custom_call.1} parent=1 // loop_footer
      %s18 = sadd.s32 1, %s14
    $region7: #{tpu_custom_call.1} parent=1 // loop_footer_branch
      %13 = sbr.rel target = $region3
    $region8: #{tpu_custom_call.1} parent=1 // loop_exit
      _
    %398 = vsyncpa [#allocation3], 1
    %s399 = scalar_lea.sflag [#allocation3], 1
    %400 = vsyncpa %s399, 1
    %401 = vsyncpa [#allocation4], 1
    %s402 = scalar_lea.sflag [#allocation4], 1
    %403 = vsyncpa %s402, 1

</llo_original>
